<compile_context>
chip_gen: v7x
topology: tpu7x:2x2x1
jax: 0.10.0
libtpu: 0.0.40
codegen_flags: <defaults>
</compile_context>

<pallas_src>
import functools

import jax
import jax.numpy as jnp
from jax.experimental import pallas as pl
from jax.experimental.pallas import tpu as pltpu


# ----------------------------------------------------------------------------
# Fused AttentionGRU kernel.
# ----------------------------------------------------------------------------
def attention_gru_kernel(facts_ref, gates_ref, w_slab_ref, b_slab_ref, out_ref,
                         *, num_sentence, batch, input_size, hidden_size):
    S, B, E, H = num_sentence, batch, input_size, hidden_size

    facts = facts_ref[...]                       # (S*B, E), row order (sid, b)
    gates = gates_ref[...]                       # (B, S)   -- lane-dim slice per step
    w_slab = w_slab_ref[...]                     # (E+H, H) = [W ; U]
    b_slab = b_slab_ref[...]                     # (2, H)   = [bW ; bU]

    W = w_slab[0:E, :]                           # (E, H)
    U = w_slab[E:E + H, :]                       # (H, H)
    bias = b_slab[0:1, :] + b_slab[1:2, :]       # (1, H): bW + bU, folded once

    # Hoisted fact-side matmul for ALL sentences + both biases (one broadcast, outside
    # the serial chain).
    wfact = jnp.dot(facts, W, preferred_element_type=jnp.float32) + bias   # (S*B, H)

    # NOTE: reference AttentionGRUCell also computes z = sigmoid(Wr(fact) + Ur(h)),
    # but z is never used -> skipped (dead code, output is identical).
    h = jnp.zeros((B, H), dtype=jnp.float32)
    for s in range(S):                           # fully unrolled, tiny trip count
        h_hat = jnp.tanh(wfact[s * B:(s + 1) * B, :]
                         + jnp.dot(h, U, preferred_element_type=jnp.float32))
        g = gates[:, s:s + 1]                    # (B, 1) static 2-D slice, broadcasts over H
        h = g * h_hat + (1.0 - g) * h
    out_ref[...] = h


# ----------------------------------------------------------------------------
# Parameters (xavier-normal-like, deterministic) -- pre-packed into slabs.
# ----------------------------------------------------------------------------
def xavier_normal(key, shape):
    fan_in, fan_out = shape
    std = (2.0 / (fan_in + fan_out)) ** 0.5
    return std * jax.random.normal(key, shape, dtype=jnp.float32)


def make_params(key, input_size, hidden_size):
    E, H = input_size, hidden_size
    ks = jax.random.split(key, 8)
    # Weights stored transposed to (in, out) so the kernel does y = x @ W + b.
    W = xavier_normal(ks[0], (E, H))
    U = xavier_normal(ks[1], (H, H))
    bW = 0.05 * jax.random.normal(ks[2], (H,), dtype=jnp.float32)
    bU = 0.05 * jax.random.normal(ks[3], (H,), dtype=jnp.float32)
    # Wr / Ur exist in the reference module but never influence the forward output.
    Wr = xavier_normal(ks[4], (E, H))
    Ur = xavier_normal(ks[5], (H, H))
    params = {
        "W": W, "bW": bW, "U": U, "bU": bU,
        "Wr": Wr, "Ur": Ur,                      # unused in forward (dead z gate)
        # Host-side packed slabs (built once, reused every call) -> 2 DMAs, not 4+.
        "w_slab": jnp.concatenate([W, U], axis=0),            # (E+H, H)
        "b_slab": jnp.stack([bW, bU], axis=0),                 # (2, H)
    }
    return params


# ----------------------------------------------------------------------------
# Forward wrapper (mirrors AttentionGRU.forward(facts, gates)).
# ----------------------------------------------------------------------------
def attention_gru_forward(params, facts, gates):
    S, B, E = facts.shape
    H = params["U"].shape[1]

    facts_flat = facts.reshape(S * B, E)         # contiguous view, row (sid, b)
    gates_t = jnp.transpose(gates)               # (B, S): lets the kernel take (B,1) slices

    kernel = functools.partial(attention_gru_kernel, num_sentence=S, batch=B,
                               input_size=E, hidden_size=H)
    vmem = pl.BlockSpec(memory_space=pltpu.MemorySpace.VMEM)

    return pl.pallas_call(
        kernel,
        out_shape=jax.ShapeDtypeStruct((B, H), jnp.float32),
        in_specs=[vmem, vmem, vmem, vmem],
        out_specs=vmem,
    )(facts_flat, gates_t, params["w_slab"], params["b_slab"])


# ----------------------------------------------------------------------------
# Pure-JAX reference (direct transcription of the PyTorch loop) for verification.
# ----------------------------------------------------------------------------
def attention_gru_reference(params, facts, gates):
    S, B, E = facts.shape
    H = params["U"].shape[1]
    h = jnp.zeros((B, H), dtype=jnp.float32)
    for s in range(S):
        f = facts[s]
        h_hat = jnp.tanh(f @ params["W"] + params["bW"] + h @ params["U"] + params["bU"])
        g = gates[s][:, None]
        h = g * h_hat + (1.0 - g) * h
    return h


if __name__ == "__main__":
    num_sentence = 6
    batch = 4
    input_size = 32
    hidden_size = 32        # reference's hidden.expand_as(fact) implies E == H

    key = jax.random.PRNGKey(0)
    kp, kf, kg = jax.random.split(key, 3)
    params = make_params(kp, input_size, hidden_size)

    facts = jax.random.normal(kf, (num_sentence, batch, input_size), dtype=jnp.float32)
    # Attention gates in [0, 1] (as produced by the DMN's softmax upstream).
    gates = jax.nn.softmax(jax.random.normal(kg, (num_sentence, batch),
                                             dtype=jnp.float32), axis=0)

    out = attention_gru_forward(params, facts, gates)
    out = jax.block_until_ready(out)

    ref = attention_gru_reference(params, facts, gates)
    assert out.shape == (batch, hidden_size)
    assert bool(jnp.all(jnp.isfinite(out)))
    assert bool(jnp.allclose(out, ref, atol=1e-5, rtol=1e-5)), "mismatch vs reference"
    print("KERNEL_OK")
</pallas_src>

<mosaic_0001>
module attributes {stable_mosaic.version = 11 : i64} {
  func.func @attention_gru_kernel(%arg0: memref<24x32xf32, #tpu.memory_space<vmem>>, %arg1: memref<4x6xf32, #tpu.memory_space<vmem>>, %arg2: memref<64x32xf32, #tpu.memory_space<vmem>>, %arg3: memref<2x32xf32, #tpu.memory_space<vmem>>, %arg4: memref<4x32xf32, #tpu.memory_space<vmem>>) attributes {dimension_semantics = [], scalar_prefetch = 0 : i64, scratch_operands = 0 : i64, tpu.core_type = #tpu.core_type<tc>} {
    %c0 = arith.constant 0 : index
    %c0_0 = arith.constant 0 : index
    %0 = vector.load %arg0[%c0, %c0_0] : memref<24x32xf32, #tpu.memory_space<vmem>>, vector<24x32xf32>
    %c0_1 = arith.constant 0 : index
    %c0_2 = arith.constant 0 : index
    %1 = vector.load %arg1[%c0_1, %c0_2] : memref<4x6xf32, #tpu.memory_space<vmem>>, vector<4x6xf32>
    %c0_3 = arith.constant 0 : index
    %c0_4 = arith.constant 0 : index
    %2 = vector.load %arg2[%c0_3, %c0_4] : memref<64x32xf32, #tpu.memory_space<vmem>>, vector<64x32xf32>
    %c0_5 = arith.constant 0 : index
    %c0_6 = arith.constant 0 : index
    %3 = vector.load %arg3[%c0_5, %c0_6] : memref<2x32xf32, #tpu.memory_space<vmem>>, vector<2x32xf32>
    %4 = vector.extract_strided_slice %2 {offsets = [0, 0], sizes = [32, 32], strides = [1, 1]} : vector<64x32xf32> to vector<32x32xf32>
    %5 = vector.extract_strided_slice %2 {offsets = [32, 0], sizes = [32, 32], strides = [1, 1]} : vector<64x32xf32> to vector<32x32xf32>
    %6 = vector.extract_strided_slice %3 {offsets = [0, 0], sizes = [1, 32], strides = [1, 1]} : vector<2x32xf32> to vector<1x32xf32>
    %7 = vector.extract_strided_slice %3 {offsets = [1, 0], sizes = [1, 32], strides = [1, 1]} : vector<2x32xf32> to vector<1x32xf32>
    %8 = arith.addf %6, %7 : vector<1x32xf32>
    %cst = arith.constant dense<0.000000e+00> : vector<24x32xf32>
    %9 = tpu.matmul %0, %4, %cst {dimension_numbers = #tpu.dot_dimension_numbers<[1], [0], [0], [1], [0, 0, 1, 1], [], []>} : vector<24x32xf32>, vector<32x32xf32>, vector<24x32xf32> -> vector<24x32xf32>
    %10 = vector.broadcast %8 : vector<1x32xf32> to vector<24x32xf32>
    %11 = arith.addf %9, %10 : vector<24x32xf32>
    %cst_7 = arith.constant 0.000000e+00 : f32
    %12 = vector.broadcast %cst_7 : f32 to vector<4x32xf32>
    %13 = vector.extract_strided_slice %11 {offsets = [0, 0], sizes = [4, 32], strides = [1, 1]} : vector<24x32xf32> to vector<4x32xf32>
    %cst_8 = arith.constant dense<0.000000e+00> : vector<4x32xf32>
    %14 = tpu.matmul %12, %5, %cst_8 {dimension_numbers = #tpu.dot_dimension_numbers<[1], [0], [0], [1], [0, 0, 1, 1], [], []>} : vector<4x32xf32>, vector<32x32xf32>, vector<4x32xf32> -> vector<4x32xf32>
    %15 = arith.addf %13, %14 : vector<4x32xf32>
    %16 = math.tanh %15 : vector<4x32xf32>
    %17 = vector.extract_strided_slice %1 {offsets = [0, 0], sizes = [4, 1], strides = [1, 1]} : vector<4x6xf32> to vector<4x1xf32>
    %18 = vector.broadcast %17 : vector<4x1xf32> to vector<4x32xf32>
    %19 = arith.mulf %18, %16 : vector<4x32xf32>
    %cst_9 = arith.constant 1.000000e+00 : f32
    %20 = vector.broadcast %cst_9 : f32 to vector<4x1xf32>
    %21 = arith.subf %20, %17 : vector<4x1xf32>
    %22 = vector.broadcast %21 : vector<4x1xf32> to vector<4x32xf32>
    %23 = arith.mulf %22, %12 : vector<4x32xf32>
    %24 = arith.addf %19, %23 : vector<4x32xf32>
    %25 = vector.extract_strided_slice %11 {offsets = [4, 0], sizes = [4, 32], strides = [1, 1]} : vector<24x32xf32> to vector<4x32xf32>
    %cst_10 = arith.constant dense<0.000000e+00> : vector<4x32xf32>
    %26 = tpu.matmul %24, %5, %cst_10 {dimension_numbers = #tpu.dot_dimension_numbers<[1], [0], [0], [1], [0, 0, 1, 1], [], []>} : vector<4x32xf32>, vector<32x32xf32>, vector<4x32xf32> -> vector<4x32xf32>
    %27 = arith.addf %25, %26 : vector<4x32xf32>
    %28 = math.tanh %27 : vector<4x32xf32>
    %29 = vector.extract_strided_slice %1 {offsets = [0, 1], sizes = [4, 1], strides = [1, 1]} : vector<4x6xf32> to vector<4x1xf32>
    %30 = vector.broadcast %29 : vector<4x1xf32> to vector<4x32xf32>
    %31 = arith.mulf %30, %28 : vector<4x32xf32>
    %cst_11 = arith.constant 1.000000e+00 : f32
    %32 = vector.broadcast %cst_11 : f32 to vector<4x1xf32>
    %33 = arith.subf %32, %29 : vector<4x1xf32>
    %34 = vector.broadcast %33 : vector<4x1xf32> to vector<4x32xf32>
    %35 = arith.mulf %34, %24 : vector<4x32xf32>
    %36 = arith.addf %31, %35 : vector<4x32xf32>
    %37 = vector.extract_strided_slice %11 {offsets = [8, 0], sizes = [4, 32], strides = [1, 1]} : vector<24x32xf32> to vector<4x32xf32>
    %cst_12 = arith.constant dense<0.000000e+00> : vector<4x32xf32>
    %38 = tpu.matmul %36, %5, %cst_12 {dimension_numbers = #tpu.dot_dimension_numbers<[1], [0], [0], [1], [0, 0, 1, 1], [], []>} : vector<4x32xf32>, vector<32x32xf32>, vector<4x32xf32> -> vector<4x32xf32>
    %39 = arith.addf %37, %38 : vector<4x32xf32>
    %40 = math.tanh %39 : vector<4x32xf32>
    %41 = vector.extract_strided_slice %1 {offsets = [0, 2], sizes = [4, 1], strides = [1, 1]} : vector<4x6xf32> to vector<4x1xf32>
    %42 = vector.broadcast %41 : vector<4x1xf32> to vector<4x32xf32>
    %43 = arith.mulf %42, %40 : vector<4x32xf32>
    %cst_13 = arith.constant 1.000000e+00 : f32
    %44 = vector.broadcast %cst_13 : f32 to vector<4x1xf32>
    %45 = arith.subf %44, %41 : vector<4x1xf32>
    %46 = vector.broadcast %45 : vector<4x1xf32> to vector<4x32xf32>
    %47 = arith.mulf %46, %36 : vector<4x32xf32>
    %48 = arith.addf %43, %47 : vector<4x32xf32>
    %49 = vector.extract_strided_slice %11 {offsets = [12, 0], sizes = [4, 32], strides = [1, 1]} : vector<24x32xf32> to vector<4x32xf32>
    %cst_14 = arith.constant dense<0.000000e+00> : vector<4x32xf32>
    %50 = tpu.matmul %48, %5, %cst_14 {dimension_numbers = #tpu.dot_dimension_numbers<[1], [0], [0], [1], [0, 0, 1, 1], [], []>} : vector<4x32xf32>, vector<32x32xf32>, vector<4x32xf32> -> vector<4x32xf32>
    %51 = arith.addf %49, %50 : vector<4x32xf32>
    %52 = math.tanh %51 : vector<4x32xf32>
    %53 = vector.extract_strided_slice %1 {offsets = [0, 3], sizes = [4, 1], strides = [1, 1]} : vector<4x6xf32> to vector<4x1xf32>
    %54 = vector.broadcast %53 : vector<4x1xf32> to vector<4x32xf32>
    %55 = arith.mulf %54, %52 : vector<4x32xf32>
    %cst_15 = arith.constant 1.000000e+00 : f32
    %56 = vector.broadcast %cst_15 : f32 to vector<4x1xf32>
    %57 = arith.subf %56, %53 : vector<4x1xf32>
    %58 = vector.broadcast %57 : vector<4x1xf32> to vector<4x32xf32>
    %59 = arith.mulf %58, %48 : vector<4x32xf32>
    %60 = arith.addf %55, %59 : vector<4x32xf32>
    %61 = vector.extract_strided_slice %11 {offsets = [16, 0], sizes = [4, 32], strides = [1, 1]} : vector<24x32xf32> to vector<4x32xf32>
    %cst_16 = arith.constant dense<0.000000e+00> : vector<4x32xf32>
    %62 = tpu.matmul %60, %5, %cst_16 {dimension_numbers = #tpu.dot_dimension_numbers<[1], [0], [0], [1], [0, 0, 1, 1], [], []>} : vector<4x32xf32>, vector<32x32xf32>, vector<4x32xf32> -> vector<4x32xf32>
    %63 = arith.addf %61, %62 : vector<4x32xf32>
    %64 = math.tanh %63 : vector<4x32xf32>
    %65 = vector.extract_strided_slice %1 {offsets = [0, 4], sizes = [4, 1], strides = [1, 1]} : vector<4x6xf32> to vector<4x1xf32>
    %66 = vector.broadcast %65 : vector<4x1xf32> to vector<4x32xf32>
    %67 = arith.mulf %66, %64 : vector<4x32xf32>
    %cst_17 = arith.constant 1.000000e+00 : f32
    %68 = vector.broadcast %cst_17 : f32 to vector<4x1xf32>
    %69 = arith.subf %68, %65 : vector<4x1xf32>
    %70 = vector.broadcast %69 : vector<4x1xf32> to vector<4x32xf32>
    %71 = arith.mulf %70, %60 : vector<4x32xf32>
    %72 = arith.addf %67, %71 : vector<4x32xf32>
    %73 = vector.extract_strided_slice %11 {offsets = [20, 0], sizes = [4, 32], strides = [1, 1]} : vector<24x32xf32> to vector<4x32xf32>
    %cst_18 = arith.constant dense<0.000000e+00> : vector<4x32xf32>
    %74 = tpu.matmul %72, %5, %cst_18 {dimension_numbers = #tpu.dot_dimension_numbers<[1], [0], [0], [1], [0, 0, 1, 1], [], []>} : vector<4x32xf32>, vector<32x32xf32>, vector<4x32xf32> -> vector<4x32xf32>
    %75 = arith.addf %73, %74 : vector<4x32xf32>
    %76 = math.tanh %75 : vector<4x32xf32>
    %77 = vector.extract_strided_slice %1 {offsets = [0, 5], sizes = [4, 1], strides = [1, 1]} : vector<4x6xf32> to vector<4x1xf32>
    %78 = vector.broadcast %77 : vector<4x1xf32> to vector<4x32xf32>
    %79 = arith.mulf %78, %76 : vector<4x32xf32>
    %cst_19 = arith.constant 1.000000e+00 : f32
    %80 = vector.broadcast %cst_19 : f32 to vector<4x1xf32>
    %81 = arith.subf %80, %77 : vector<4x1xf32>
    %82 = vector.broadcast %81 : vector<4x1xf32> to vector<4x32xf32>
    %83 = arith.mulf %82, %72 : vector<4x32xf32>
    %84 = arith.addf %79, %83 : vector<4x32xf32>
    %c0_20 = arith.constant 0 : index
    %c0_21 = arith.constant 0 : index
    %85 = vector.load %arg4[%c0_20, %c0_21] : memref<4x32xf32, #tpu.memory_space<vmem>>, vector<4x32xf32>
    tpu.vector_store %arg4[%c0_20, %c0_21], %84 {strides = array<i32>} : memref<4x32xf32, #tpu.memory_space<vmem>>, vector<4x32xf32>,
    return
  }
}

</mosaic_0001>

<llo_original>
// kernel: tpu_custom_call.1
$region0: #{tpu_custom_call.1}
  #allocation0 [shape = 'u32[]', space=smem, size = 0x4, offset = 0x4, fixed_abs, tag = 'smem constant byte address 0x4 - core index']
  #allocation1 [shape = 'u32[144,128]{1,0:T(1,128)}', space=vmem, size = 0x12000, scoped, tag = 'internal scratch']
  %s0 = inlined_call_operand.vmem [shape: f32[24,32], index: 0, kind: input, shape index: {}]
  %s1 = inlined_call_operand.vmem [shape: f32[4,6], index: 1, kind: input, shape index: {}]
  %s2 = inlined_call_operand.vmem [shape: f32[64,32], index: 2, kind: input, shape index: {}]
  %s3 = inlined_call_operand.vmem [shape: f32[2,32], index: 3, kind: input, shape index: {}]
  %s4 = inlined_call_operand.hbm [shape: f32[4,32], index: 4, kind: output, shape index: {}]
  %s5 = sld [smem:[#allocation0]]
  $region26: #{tpu_custom_call.1} parent=0
    _
  %s7 = ssub.s32 1, %s5
  %s8 = scalar_select 0, %s7, %s5
  $region1: #{tpu_custom_call.1} parent=0
    #allocation2 [shape = 'u8[2048]{0}', space=vmem, size = 0x800, scoped, tag = 'output window, operand 0, single buffered']
    #allocation3 [shape = 's32[1]{0}', space=sflag, size = 0x4, scoped, tag = 'scoped memory for tpu_custom_call.1']
    %9 = vsyncpa [#allocation3], 0
    // Predicated region
    $region2: #{tpu_custom_call.1} parent=1 // pred_check
      _
    $region3: #{tpu_custom_call.1} parent=1 // pred_check_branch
      %11 = sbr.rel (0) target = $region5
    $region4: #{tpu_custom_call.1} parent=1 // pred_region
      _
    $region5: #{tpu_custom_call.1} parent=1 // pred_fallthru
      _
    // Predicated region
    $region6: #{tpu_custom_call.1} parent=1 // pred_check
      _
    $region7: #{tpu_custom_call.1} parent=1 // pred_check_branch
      %13 = sbr.rel (0) target = $region9
    $region8: #{tpu_custom_call.1} parent=1 // pred_region
      _
    $region9: #{tpu_custom_call.1} parent=1 // pred_fallthru
      _
    // Predicated region
    $region10: #{tpu_custom_call.1} parent=1 // pred_check
      _
    $region11: #{tpu_custom_call.1} parent=1 // pred_check_branch
      %15 = sbr.rel (0) target = $region13
    $region12: #{tpu_custom_call.1} parent=1 // pred_region
      _
    $region13: #{tpu_custom_call.1} parent=1 // pred_fallthru
      _
    // Predicated region
    $region14: #{tpu_custom_call.1} parent=1 // pred_check
      _
    $region15: #{tpu_custom_call.1} parent=1 // pred_check_branch
      %17 = sbr.rel (0) target = $region17
    $region16: #{tpu_custom_call.1} parent=1 // pred_region
      _
    $region17: #{tpu_custom_call.1} parent=1 // pred_fallthru
      _
    %v18 = vld [vmem:[%s0] sm:$0xff]
    %v19 = vld [vmem:[%s0 + $0x8] sm:$0xff]
    %v20 = vld [vmem:[%s0 + $0x10] sm:$0xff]
    %v21 = vld [vmem:[%s1] sm:$0xf]
    %v22 = vld [vmem:[%s2] sm:$0xff]
    %v23 = vld [vmem:[%s2 + $0x8] sm:$0xff]
    %v24 = vld [vmem:[%s2 + $0x10] sm:$0xff]
    %v25 = vld [vmem:[%s2 + $0x18] sm:$0xff]
    %v26 = vld [vmem:[%s2 + $0x20] sm:$0xff]
    %v27 = vld [vmem:[%s2 + $0x28] sm:$0xff]
    %v28 = vld [vmem:[%s2 + $0x30] sm:$0xff]
    %v29 = vld [vmem:[%s2 + $0x38] sm:$0xff]
    %v30 = vld [vmem:[%s3] sm:$0x3]
    %v32 = vrot.slane %v30, 1
    %v34 = vadd.f32 %v30, %v32
    %v35 = vlaneseq
    %v36 = vshrl.u32 %v35, 7
    %v37 = vsub.s32 0, %v36
    %v38 = vrot.slane %v34, %v37
    %vm39 = vcmask 261120
    %v41 = vsel %vm39, %v18, 0
    %v44 = vsel %vm39, %v19, 0
    %v47 = vsel %vm39, %v20, 0
    %49 = vmatprep.subr.mxu0 0.0
    %50 = vmatpush1.msra.mxu0 %v22
    %51 = vmatprep.subr.mxu0 0.0
    %52 = vmatpush1.msra.mxu0 %v23
    %53 = vmatprep.subr.mxu0 0.0
    %54 = vmatpush1.msra.mxu0 %v24
    %55 = vmatprep.subr.mxu0 0.0
    %56 = vmatpush1.msra.mxu0 %v25
    %57 = vmatprep.subr.mxu0 0.0
    %58 = vmatpush1.msra.mxu0 0.0
    %59 = vmatprep.subr.mxu0 0.0
    %60 = vmatpush1.msra.mxu0 0.0
    %61 = vmatprep.subr.mxu0 0.0
    %62 = vmatpush1.msra.mxu0 0.0
    %63 = vmatprep.subr.mxu0 0.0
    %64 = vmatpush1.msra.mxu0 0.0
    %65 = vmatprep.subr.mxu0 0.0
    %66 = vmatpush1.msra.mxu0 0.0
    %67 = vmatprep.subr.mxu0 0.0
    %68 = vmatpush1.msra.mxu0 0.0
    %69 = vmatprep.subr.mxu0 0.0
    %70 = vmatpush1.msra.mxu0 0.0
    %71 = vmatprep.subr.mxu0 0.0
    %72 = vmatpush1.msra.mxu0 0.0
    %73 = vmatprep.subr.mxu0 0.0
    %74 = vmatpush1.msra.mxu0 0.0
    %75 = vmatprep.subr.mxu0 0.0
    %76 = vmatpush1.msra.mxu0 0.0
    %77 = vmatprep.subr.mxu0 0.0
    %78 = vmatpush1.msra.mxu0 0.0
    %79 = vmatprep.subr.mxu0 0.0
    %80 = vmatpush1.msra.mxu0 0.0
    %81 = vmatprep.subr.mxu0 0.0
    %82 = vmatpush1.msra.mxu0 0.0
    %83 = vmatprep.subr.mxu0 0.0
    %84 = vmatpush1.msra.mxu0 0.0
    %85 = vmatprep.subr.mxu0 0.0
    %86 = vmatpush1.msra.mxu0 0.0
    %87 = vmatprep.subr.mxu0 0.0
    %88 = vmatpush1.msra.mxu0 0.0
    %89 = vmatprep.subr.mxu0 0.0
    %90 = vmatpush1.msra.mxu0 0.0
    %91 = vmatprep.subr.mxu0 0.0
    %92 = vmatpush1.msra.mxu0 0.0
    %93 = vmatprep.subr.mxu0 0.0
    %94 = vmatpush1.msra.mxu0 0.0
    %95 = vmatprep.subr.mxu0 0.0
    %96 = vmatpush1.msra.mxu0 0.0
    %97 = vmatprep.subr.mxu0 0.0
    %98 = vmatpush1.msra.mxu0 0.0
    %99 = vmatprep.subr.mxu0 0.0
    %100 = vmatpush1.msra.mxu0 0.0
    %101 = vmatprep.subr.mxu0 0.0
    %102 = vmatpush1.msra.mxu0 0.0
    %103 = vmatprep.subr.mxu0 0.0
    %104 = vmatpush1.msra.mxu0 0.0
    %105 = vmatprep.subr.mxu0 0.0
    %106 = vmatpush1.msra.mxu0 0.0
    %107 = vmatprep.subr.mxu0 0.0
    %108 = vmatpush1.msra.mxu0 0.0
    %109 = vmatprep.subr.mxu0 0.0
    %110 = vmatpush1.msra.mxu0 0.0
    %111 = vmatprep.subr.mxu0 0.0
    %112 = vmatpush1.msra.mxu0 0.0
    %113 = vmatprep.mubr.f32.mxu0 0.0
    %114 = vmatmul.mubr.f32.gmra.mrb[0].mxu0 %v41
    %v115 = vpop.f32.mrb[0].mxu0
    %v116 = vadd.f32 %v38, %v115
    %v117 = vpop.f32.mrb[0].mxu0
    %118 = vmatprep.mubr.f32.mxu0 0.0
    %119 = vmatmul.mubr.f32.gmra.mrb[0].mxu0 %v44
    %v120 = vpop.f32.mrb[0].mxu0
    %v121 = vadd.f32 %v38, %v120
    %v122 = vpop.f32.mrb[0].mxu0
    %123 = vmatprep.mubr.f32.mxu0 0.0
    %124 = vmatmul.mubr.f32.gmra.mrb[0].mxu0 %v47
    %v125 = vpop.f32.mrb[0].mxu0
    %v126 = vadd.f32 %v38, %v125
    %v127 = vpop.f32.mrb[0].mxu0
    %128 = vdwg.mxu0
    %v130 = vsel %vm39, 0.0, 0
    %132 = vmatprep.subr.mxu0 0.0
    %133 = vmatpush1.msra.mxu0 %v26
    %134 = vmatprep.subr.mxu0 0.0
    %135 = vmatpush1.msra.mxu0 %v27
    %136 = vmatprep.subr.mxu0 0.0
    %137 = vmatpush1.msra.mxu0 %v28
    %138 = vmatprep.subr.mxu0 0.0
    %139 = vmatpush1.msra.mxu0 %v29
    %140 = vmatprep.subr.mxu0 0.0
    %141 = vmatpush1.msra.mxu0 0.0
    %142 = vmatprep.subr.mxu0 0.0
    %143 = vmatpush1.msra.mxu0 0.0
    %144 = vmatprep.subr.mxu0 0.0
    %145 = vmatpush1.msra.mxu0 0.0
    %146 = vmatprep.subr.mxu0 0.0
    %147 = vmatpush1.msra.mxu0 0.0
    %148 = vmatprep.subr.mxu0 0.0
    %149 = vmatpush1.msra.mxu0 0.0
    %150 = vmatprep.subr.mxu0 0.0
    %151 = vmatpush1.msra.mxu0 0.0
    %152 = vmatprep.subr.mxu0 0.0
    %153 = vmatpush1.msra.mxu0 0.0
    %154 = vmatprep.subr.mxu0 0.0
    %155 = vmatpush1.msra.mxu0 0.0
    %156 = vmatprep.subr.mxu0 0.0
    %157 = vmatpush1.msra.mxu0 0.0
    %158 = vmatprep.subr.mxu0 0.0
    %159 = vmatpush1.msra.mxu0 0.0
    %160 = vmatprep.subr.mxu0 0.0
    %161 = vmatpush1.msra.mxu0 0.0
    %162 = vmatprep.subr.mxu0 0.0
    %163 = vmatpush1.msra.mxu0 0.0
    %164 = vmatprep.subr.mxu0 0.0
    %165 = vmatpush1.msra.mxu0 0.0
    %166 = vmatprep.subr.mxu0 0.0
    %167 = vmatpush1.msra.mxu0 0.0
    %168 = vmatprep.subr.mxu0 0.0
    %169 = vmatpush1.msra.mxu0 0.0
    %170 = vmatprep.subr.mxu0 0.0
    %171 = vmatpush1.msra.mxu0 0.0
    %172 = vmatprep.subr.mxu0 0.0
    %173 = vmatpush1.msra.mxu0 0.0
    %174 = vmatprep.subr.mxu0 0.0
    %175 = vmatpush1.msra.mxu0 0.0
    %176 = vmatprep.subr.mxu0 0.0
    %177 = vmatpush1.msra.mxu0 0.0
    %178 = vmatprep.subr.mxu0 0.0
    %179 = vmatpush1.msra.mxu0 0.0
    %180 = vmatprep.subr.mxu0 0.0
    %181 = vmatpush1.msra.mxu0 0.0
    %182 = vmatprep.subr.mxu0 0.0
    %183 = vmatpush1.msra.mxu0 0.0
    %184 = vmatprep.subr.mxu0 0.0
    %185 = vmatpush1.msra.mxu0 0.0
    %186 = vmatprep.subr.mxu0 0.0
    %187 = vmatpush1.msra.mxu0 0.0
    %188 = vmatprep.subr.mxu0 0.0
    %189 = vmatpush1.msra.mxu0 0.0
    %190 = vmatprep.subr.mxu0 0.0
    %191 = vmatpush1.msra.mxu0 0.0
    %192 = vmatprep.subr.mxu0 0.0
    %193 = vmatpush1.msra.mxu0 0.0
    %194 = vmatprep.subr.mxu0 0.0
    %195 = vmatpush1.msra.mxu0 0.0
    %196 = vmatprep.mubr.f32.mxu0 0.0
    %197 = vmatmul.mubr.f32.gmra.mrb[0].mxu0 %v130
    %v198 = vpop.f32.mrb[0].mxu0
    %v199 = vadd.f32 0.0, %v198
    %v200 = vpop.f32.mrb[0].mxu0
    %201 = vdwg.mxu0
    %v202 = vadd.f32 %v116, %v199
    %v203 = vtanh.pop %v202
    %205 = vset.pattern.permute.xlu0 0
    %206 = vperm.xlu0 %205, %v21
    %v207 = vpop.permute.xlu0 %206
    %v209 = vmul.f32 %v207, %v203
    %v210 = vsub.f32 1.0, %v21
    %212 = vset.pattern.permute.xlu0 0
    %213 = vperm.xlu0 %212, %v210
    %v214 = vpop.permute.xlu0 %213
    %v216 = vmul.f32 %v214, 0.0
    %v217 = vadd.f32 %v209, %v216
    %v219 = vsel %vm39, %v217, 0
    %221 = vmatprep.subr.mxu0 0.0
    %222 = vmatpush1.msra.mxu0 %v26
    %223 = vmatprep.subr.mxu0 0.0
    %224 = vmatpush1.msra.mxu0 %v27
    %225 = vmatprep.subr.mxu0 0.0
    %226 = vmatpush1.msra.mxu0 %v28
    %227 = vmatprep.subr.mxu0 0.0
    %228 = vmatpush1.msra.mxu0 %v29
    %229 = vmatprep.subr.mxu0 0.0
    %230 = vmatpush1.msra.mxu0 0.0
    %231 = vmatprep.subr.mxu0 0.0
    %232 = vmatpush1.msra.mxu0 0.0
    %233 = vmatprep.subr.mxu0 0.0
    %234 = vmatpush1.msra.mxu0 0.0
    %235 = vmatprep.subr.mxu0 0.0
    %236 = vmatpush1.msra.mxu0 0.0
    %237 = vmatprep.subr.mxu0 0.0
    %238 = vmatpush1.msra.mxu0 0.0
    %239 = vmatprep.subr.mxu0 0.0
    %240 = vmatpush1.msra.mxu0 0.0
    %241 = vmatprep.subr.mxu0 0.0
    %242 = vmatpush1.msra.mxu0 0.0
    %243 = vmatprep.subr.mxu0 0.0
    %244 = vmatpush1.msra.mxu0 0.0
    %245 = vmatprep.subr.mxu0 0.0
    %246 = vmatpush1.msra.mxu0 0.0
    %247 = vmatprep.subr.mxu0 0.0
    %248 = vmatpush1.msra.mxu0 0.0
    %249 = vmatprep.subr.mxu0 0.0
    %250 = vmatpush1.msra.mxu0 0.0
    %251 = vmatprep.subr.mxu0 0.0
    %252 = vmatpush1.msra.mxu0 0.0
    %253 = vmatprep.subr.mxu0 0.0
    %254 = vmatpush1.msra.mxu0 0.0
    %255 = vmatprep.subr.mxu0 0.0
    %256 = vmatpush1.msra.mxu0 0.0
    %257 = vmatprep.subr.mxu0 0.0
    %258 = vmatpush1.msra.mxu0 0.0
    %259 = vmatprep.subr.mxu0 0.0
    %260 = vmatpush1.msra.mxu0 0.0
    %261 = vmatprep.subr.mxu0 0.0
    %262 = vmatpush1.msra.mxu0 0.0
    %263 = vmatprep.subr.mxu0 0.0
    %264 = vmatpush1.msra.mxu0 0.0
    %265 = vmatprep.subr.mxu0 0.0
    %266 = vmatpush1.msra.mxu0 0.0
    %267 = vmatprep.subr.mxu0 0.0
    %268 = vmatpush1.msra.mxu0 0.0
    %269 = vmatprep.subr.mxu0 0.0
    %270 = vmatpush1.msra.mxu0 0.0
    %271 = vmatprep.subr.mxu0 0.0
    %272 = vmatpush1.msra.mxu0 0.0
    %273 = vmatprep.subr.mxu0 0.0
    %274 = vmatpush1.msra.mxu0 0.0
    %275 = vmatprep.subr.mxu0 0.0
    %276 = vmatpush1.msra.mxu0 0.0
    %277 = vmatprep.subr.mxu0 0.0
    %278 = vmatpush1.msra.mxu0 0.0
    %279 = vmatprep.subr.mxu0 0.0
    %280 = vmatpush1.msra.mxu0 0.0
    %281 = vmatprep.subr.mxu0 0.0
    %282 = vmatpush1.msra.mxu0 0.0
    %283 = vmatprep.subr.mxu0 0.0
    %284 = vmatpush1.msra.mxu0 0.0
    %285 = vmatprep.mubr.f32.mxu0 0.0
    %286 = vmatmul.mubr.f32.gmra.mrb[0].mxu0 %v219
    %v287 = vpop.f32.mrb[0].mxu0
    %v288 = vadd.f32 0.0, %v287
    %v289 = vpop.f32.mrb[0].mxu0
    %290 = vdwg.mxu0
    %v292 = vrot.slane %v288, 4
    %v294 = vadd.f32 %v116, %v292
    %v295 = vtanh.pop %v294
    %296 = vset.pattern.permute.xlu0 1
    %297 = vperm.xlu0 %296, %v21
    %v298 = vpop.permute.xlu0 %297
    %v301 = vrot.slane %v295, 4
    %v303 = vmul.f32 %v298, %v301
    %304 = vset.pattern.permute.xlu0 1
    %305 = vperm.xlu0 %304, %v210
    %v306 = vpop.permute.xlu0 %305
    %v308 = vmul.f32 %v306, %v217
    %v309 = vadd.f32 %v303, %v308
    %v311 = vsel %vm39, %v309, 0
    %313 = vmatprep.subr.mxu0 0.0
    %314 = vmatpush1.msra.mxu0 %v26
    %315 = vmatprep.subr.mxu0 0.0
    %316 = vmatpush1.msra.mxu0 %v27
    %317 = vmatprep.subr.mxu0 0.0
    %318 = vmatpush1.msra.mxu0 %v28
    %319 = vmatprep.subr.mxu0 0.0
    %320 = vmatpush1.msra.mxu0 %v29
    %321 = vmatprep.subr.mxu0 0.0
    %322 = vmatpush1.msra.mxu0 0.0
    %323 = vmatprep.subr.mxu0 0.0
    %324 = vmatpush1.msra.mxu0 0.0
    %325 = vmatprep.subr.mxu0 0.0
    %326 = vmatpush1.msra.mxu0 0.0
    %327 = vmatprep.subr.mxu0 0.0
    %328 = vmatpush1.msra.mxu0 0.0
    %329 = vmatprep.subr.mxu0 0.0
    %330 = vmatpush1.msra.mxu0 0.0
    %331 = vmatprep.subr.mxu0 0.0
    %332 = vmatpush1.msra.mxu0 0.0
    %333 = vmatprep.subr.mxu0 0.0
    %334 = vmatpush1.msra.mxu0 0.0
    %335 = vmatprep.subr.mxu0 0.0
    %336 = vmatpush1.msra.mxu0 0.0
    %337 = vmatprep.subr.mxu0 0.0
    %338 = vmatpush1.msra.mxu0 0.0
    %339 = vmatprep.subr.mxu0 0.0
    %340 = vmatpush1.msra.mxu0 0.0
    %341 = vmatprep.subr.mxu0 0.0
    %342 = vmatpush1.msra.mxu0 0.0
    %343 = vmatprep.subr.mxu0 0.0
    %344 = vmatpush1.msra.mxu0 0.0
    %345 = vmatprep.subr.mxu0 0.0
    %346 = vmatpush1.msra.mxu0 0.0
    %347 = vmatprep.subr.mxu0 0.0
    %348 = vmatpush1.msra.mxu0 0.0
    %349 = vmatprep.subr.mxu0 0.0
    %350 = vmatpush1.msra.mxu0 0.0
    %351 = vmatprep.subr.mxu0 0.0
    %352 = vmatpush1.msra.mxu0 0.0
    %353 = vmatprep.subr.mxu0 0.0
    %354 = vmatpush1.msra.mxu0 0.0
    %355 = vmatprep.subr.mxu0 0.0
    %356 = vmatpush1.msra.mxu0 0.0
    %357 = vmatprep.subr.mxu0 0.0
    %358 = vmatpush1.msra.mxu0 0.0
    %359 = vmatprep.subr.mxu0 0.0
    %360 = vmatpush1.msra.mxu0 0.0
    %361 = vmatprep.subr.mxu0 0.0
    %362 = vmatpush1.msra.mxu0 0.0
    %363 = vmatprep.subr.mxu0 0.0
    %364 = vmatpush1.msra.mxu0 0.0
    %365 = vmatprep.subr.mxu0 0.0
    %366 = vmatpush1.msra.mxu0 0.0
    %367 = vmatprep.subr.mxu0 0.0
    %368 = vmatpush1.msra.mxu0 0.0
    %369 = vmatprep.subr.mxu0 0.0
    %370 = vmatpush1.msra.mxu0 0.0
    %371 = vmatprep.subr.mxu0 0.0
    %372 = vmatpush1.msra.mxu0 0.0
    %373 = vmatprep.subr.mxu0 0.0
    %374 = vmatpush1.msra.mxu0 0.0
    %375 = vmatprep.subr.mxu0 0.0
    %376 = vmatpush1.msra.mxu0 0.0
    %377 = vmatprep.mubr.f32.mxu0 0.0
    %378 = vmatmul.mubr.f32.gmra.mrb[0].mxu0 %v311
    %v379 = vpop.f32.mrb[0].mxu0
    %v380 = vadd.f32 0.0, %v379
    %v381 = vpop.f32.mrb[0].mxu0
    %382 = vdwg.mxu0
    %v383 = vadd.f32 %v121, %v380
    %v384 = vtanh.pop %v383
    %385 = vset.pattern.permute.xlu0 2
    %386 = vperm.xlu0 %385, %v21
    %v387 = vpop.permute.xlu0 %386
    %v389 = vmul.f32 %v387, %v384
    %390 = vset.pattern.permute.xlu0 2
    %391 = vperm.xlu0 %390, %v210
    %v392 = vpop.permute.xlu0 %391
    %v394 = vmul.f32 %v392, %v309
    %v395 = vadd.f32 %v389, %v394
    %v397 = vsel %vm39, %v395, 0
    %399 = vmatprep.subr.mxu0 0.0
    %400 = vmatpush1.msra.mxu0 %v26
    %401 = vmatprep.subr.mxu0 0.0
    %402 = vmatpush1.msra.mxu0 %v27
    %403 = vmatprep.subr.mxu0 0.0
    %404 = vmatpush1.msra.mxu0 %v28
    %405 = vmatprep.subr.mxu0 0.0
    %406 = vmatpush1.msra.mxu0 %v29
    %407 = vmatprep.subr.mxu0 0.0
    %408 = vmatpush1.msra.mxu0 0.0
    %409 = vmatprep.subr.mxu0 0.0
    %410 = vmatpush1.msra.mxu0 0.0
    %411 = vmatprep.subr.mxu0 0.0
    %412 = vmatpush1.msra.mxu0 0.0
    %413 = vmatprep.subr.mxu0 0.0
    %414 = vmatpush1.msra.mxu0 0.0
    %415 = vmatprep.subr.mxu0 0.0
    %416 = vmatpush1.msra.mxu0 0.0
    %417 = vmatprep.subr.mxu0 0.0
    %418 = vmatpush1.msra.mxu0 0.0
    %419 = vmatprep.subr.mxu0 0.0
    %420 = vmatpush1.msra.mxu0 0.0
    %421 = vmatprep.subr.mxu0 0.0
    %422 = vmatpush1.msra.mxu0 0.0
    %423 = vmatprep.subr.mxu0 0.0
    %424 = vmatpush1.msra.mxu0 0.0
    %425 = vmatprep.subr.mxu0 0.0
    %426 = vmatpush1.msra.mxu0 0.0
    %427 = vmatprep.subr.mxu0 0.0
    %428 = vmatpush1.msra.mxu0 0.0
    %429 = vmatprep.subr.mxu0 0.0
    %430 = vmatpush1.msra.mxu0 0.0
    %431 = vmatprep.subr.mxu0 0.0
    %432 = vmatpush1.msra.mxu0 0.0
    %433 = vmatprep.subr.mxu0 0.0
    %434 = vmatpush1.msra.mxu0 0.0
    %435 = vmatprep.subr.mxu0 0.0
    %436 = vmatpush1.msra.mxu0 0.0
    %437 = vmatprep.subr.mxu0 0.0
    %438 = vmatpush1.msra.mxu0 0.0
    %439 = vmatprep.subr.mxu0 0.0
    %440 = vmatpush1.msra.mxu0 0.0
    %441 = vmatprep.subr.mxu0 0.0
    %442 = vmatpush1.msra.mxu0 0.0
    %443 = vmatprep.subr.mxu0 0.0
    %444 = vmatpush1.msra.mxu0 0.0
    %445 = vmatprep.subr.mxu0 0.0
    %446 = vmatpush1.msra.mxu0 0.0
    %447 = vmatprep.subr.mxu0 0.0
    %448 = vmatpush1.msra.mxu0 0.0
    %449 = vmatprep.subr.mxu0 0.0
    %450 = vmatpush1.msra.mxu0 0.0
    %451 = vmatprep.subr.mxu0 0.0
    %452 = vmatpush1.msra.mxu0 0.0
    %453 = vmatprep.subr.mxu0 0.0
    %454 = vmatpush1.msra.mxu0 0.0
    %455 = vmatprep.subr.mxu0 0.0
    %456 = vmatpush1.msra.mxu0 0.0
    %457 = vmatprep.subr.mxu0 0.0
    %458 = vmatpush1.msra.mxu0 0.0
    %459 = vmatprep.subr.mxu0 0.0
    %460 = vmatpush1.msra.mxu0 0.0
    %461 = vmatprep.subr.mxu0 0.0
    %462 = vmatpush1.msra.mxu0 0.0
    %463 = vmatprep.mubr.f32.mxu0 0.0
    %464 = vmatmul.mubr.f32.gmra.mrb[0].mxu0 %v397
    %v465 = vpop.f32.mrb[0].mxu0
    %v466 = vadd.f32 0.0, %v465
    %v467 = vpop.f32.mrb[0].mxu0
    %468 = vdwg.mxu0
    %v470 = vrot.slane %v466, 4
    %v472 = vadd.f32 %v121, %v470
    %v473 = vtanh.pop %v472
    %474 = vset.pattern.permute.xlu0 3
    %475 = vperm.xlu0 %474, %v21
    %v476 = vpop.permute.xlu0 %475
    %v479 = vrot.slane %v473, 4
    %v481 = vmul.f32 %v476, %v479
    %482 = vset.pattern.permute.xlu0 3
    %483 = vperm.xlu0 %482, %v210
    %v484 = vpop.permute.xlu0 %483
    %v486 = vmul.f32 %v484, %v395
    %v487 = vadd.f32 %v481, %v486
    %v489 = vsel %vm39, %v487, 0
    %491 = vmatprep.subr.mxu0 0.0
    %492 = vmatpush1.msra.mxu0 %v26
    %493 = vmatprep.subr.mxu0 0.0
    %494 = vmatpush1.msra.mxu0 %v27
    %495 = vmatprep.subr.mxu0 0.0
    %496 = vmatpush1.msra.mxu0 %v28
    %497 = vmatprep.subr.mxu0 0.0
    %498 = vmatpush1.msra.mxu0 %v29
    %499 = vmatprep.subr.mxu0 0.0
    %500 = vmatpush1.msra.mxu0 0.0
    %501 = vmatprep.subr.mxu0 0.0
    %502 = vmatpush1.msra.mxu0 0.0
    %503 = vmatprep.subr.mxu0 0.0
    %504 = vmatpush1.msra.mxu0 0.0
    %505 = vmatprep.subr.mxu0 0.0
    %506 = vmatpush1.msra.mxu0 0.0
    %507 = vmatprep.subr.mxu0 0.0
    %508 = vmatpush1.msra.mxu0 0.0
    %509 = vmatprep.subr.mxu0 0.0
    %510 = vmatpush1.msra.mxu0 0.0
    %511 = vmatprep.subr.mxu0 0.0
    %512 = vmatpush1.msra.mxu0 0.0
    %513 = vmatprep.subr.mxu0 0.0
    %514 = vmatpush1.msra.mxu0 0.0
    %515 = vmatprep.subr.mxu0 0.0
    %516 = vmatpush1.msra.mxu0 0.0
    %517 = vmatprep.subr.mxu0 0.0
    %518 = vmatpush1.msra.mxu0 0.0
    %519 = vmatprep.subr.mxu0 0.0
    %520 = vmatpush1.msra.mxu0 0.0
    %521 = vmatprep.subr.mxu0 0.0
    %522 = vmatpush1.msra.mxu0 0.0
    %523 = vmatprep.subr.mxu0 0.0
    %524 = vmatpush1.msra.mxu0 0.0
    %525 = vmatprep.subr.mxu0 0.0
    %526 = vmatpush1.msra.mxu0 0.0
    %527 = vmatprep.subr.mxu0 0.0
    %528 = vmatpush1.msra.mxu0 0.0
    %529 = vmatprep.subr.mxu0 0.0
    %530 = vmatpush1.msra.mxu0 0.0
    %531 = vmatprep.subr.mxu0 0.0
    %532 = vmatpush1.msra.mxu0 0.0
    %533 = vmatprep.subr.mxu0 0.0
    %534 = vmatpush1.msra.mxu0 0.0
    %535 = vmatprep.subr.mxu0 0.0
    %536 = vmatpush1.msra.mxu0 0.0
    %537 = vmatprep.subr.mxu0 0.0
    %538 = vmatpush1.msra.mxu0 0.0
    %539 = vmatprep.subr.mxu0 0.0
    %540 = vmatpush1.msra.mxu0 0.0
    %541 = vmatprep.subr.mxu0 0.0
    %542 = vmatpush1.msra.mxu0 0.0
    %543 = vmatprep.subr.mxu0 0.0
    %544 = vmatpush1.msra.mxu0 0.0
    %545 = vmatprep.subr.mxu0 0.0
    %546 = vmatpush1.msra.mxu0 0.0
    %547 = vmatprep.subr.mxu0 0.0
    %548 = vmatpush1.msra.mxu0 0.0
    %549 = vmatprep.subr.mxu0 0.0
    %550 = vmatpush1.msra.mxu0 0.0
    %551 = vmatprep.subr.mxu0 0.0
    %552 = vmatpush1.msra.mxu0 0.0
    %553 = vmatprep.subr.mxu0 0.0
    %554 = vmatpush1.msra.mxu0 0.0
    %555 = vmatprep.mubr.f32.mxu0 0.0
    %556 = vmatmul.mubr.f32.gmra.mrb[0].mxu0 %v489
    %v557 = vpop.f32.mrb[0].mxu0
    %v558 = vadd.f32 0.0, %v557
    %v559 = vpop.f32.mrb[0].mxu0
    %560 = vdwg.mxu0
    %v561 = vadd.f32 %v126, %v558
    %v562 = vtanh.pop %v561
    %563 = vset.pattern.permute.xlu0 4
    %564 = vperm.xlu0 %563, %v21
    %v565 = vpop.permute.xlu0 %564
    %v567 = vmul.f32 %v565, %v562
    %568 = vset.pattern.permute.xlu0 4
    %569 = vperm.xlu0 %568, %v210
    %v570 = vpop.permute.xlu0 %569
    %v572 = vmul.f32 %v570, %v487
    %v573 = vadd.f32 %v567, %v572
    %v575 = vsel %vm39, %v573, 0
    %577 = vmatprep.subr.mxu0 0.0
    %578 = vmatpush1.msra.mxu0 %v26
    %579 = vmatprep.subr.mxu0 0.0
    %580 = vmatpush1.msra.mxu0 %v27
    %581 = vmatprep.subr.mxu0 0.0
    %582 = vmatpush1.msra.mxu0 %v28
    %583 = vmatprep.subr.mxu0 0.0
    %584 = vmatpush1.msra.mxu0 %v29
    %585 = vmatprep.subr.mxu0 0.0
    %586 = vmatpush1.msra.mxu0 0.0
    %587 = vmatprep.subr.mxu0 0.0
    %588 = vmatpush1.msra.mxu0 0.0
    %589 = vmatprep.subr.mxu0 0.0
    %590 = vmatpush1.msra.mxu0 0.0
    %591 = vmatprep.subr.mxu0 0.0
    %592 = vmatpush1.msra.mxu0 0.0
    %593 = vmatprep.subr.mxu0 0.0
    %594 = vmatpush1.msra.mxu0 0.0
    %595 = vmatprep.subr.mxu0 0.0
    %596 = vmatpush1.msra.mxu0 0.0
    %597 = vmatprep.subr.mxu0 0.0
    %598 = vmatpush1.msra.mxu0 0.0
    %599 = vmatprep.subr.mxu0 0.0
    %600 = vmatpush1.msra.mxu0 0.0
    %601 = vmatprep.subr.mxu0 0.0
    %602 = vmatpush1.msra.mxu0 0.0
    %603 = vmatprep.subr.mxu0 0.0
    %604 = vmatpush1.msra.mxu0 0.0
    %605 = vmatprep.subr.mxu0 0.0
    %606 = vmatpush1.msra.mxu0 0.0
    %607 = vmatprep.subr.mxu0 0.0
    %608 = vmatpush1.msra.mxu0 0.0
    %609 = vmatprep.subr.mxu0 0.0
    %610 = vmatpush1.msra.mxu0 0.0
    %611 = vmatprep.subr.mxu0 0.0
    %612 = vmatpush1.msra.mxu0 0.0
    %613 = vmatprep.subr.mxu0 0.0
    %614 = vmatpush1.msra.mxu0 0.0
    %615 = vmatprep.subr.mxu0 0.0
    %616 = vmatpush1.msra.mxu0 0.0
    %617 = vmatprep.subr.mxu0 0.0
    %618 = vmatpush1.msra.mxu0 0.0
    %619 = vmatprep.subr.mxu0 0.0
    %620 = vmatpush1.msra.mxu0 0.0
    %621 = vmatprep.subr.mxu0 0.0
    %622 = vmatpush1.msra.mxu0 0.0
    %623 = vmatprep.subr.mxu0 0.0
    %624 = vmatpush1.msra.mxu0 0.0
    %625 = vmatprep.subr.mxu0 0.0
    %626 = vmatpush1.msra.mxu0 0.0
    %627 = vmatprep.subr.mxu0 0.0
    %628 = vmatpush1.msra.mxu0 0.0
    %629 = vmatprep.subr.mxu0 0.0
    %630 = vmatpush1.msra.mxu0 0.0
    %631 = vmatprep.subr.mxu0 0.0
    %632 = vmatpush1.msra.mxu0 0.0
    %633 = vmatprep.subr.mxu0 0.0
    %634 = vmatpush1.msra.mxu0 0.0
    %635 = vmatprep.subr.mxu0 0.0
    %636 = vmatpush1.msra.mxu0 0.0
    %637 = vmatprep.subr.mxu0 0.0
    %638 = vmatpush1.msra.mxu0 0.0
    %639 = vmatprep.subr.mxu0 0.0
    %640 = vmatpush1.msra.mxu0 0.0
    %641 = vmatprep.mubr.f32.mxu0 0.0
    %642 = vmatmul.mubr.f32.gmra.mrb[0].mxu0 %v575
    %v643 = vpop.f32.mrb[0].mxu0
    %v644 = vadd.f32 0.0, %v643
    %v645 = vpop.f32.mrb[0].mxu0
    %646 = vdwg.mxu0
    %v648 = vrot.slane %v644, 4
    %v650 = vadd.f32 %v126, %v648
    %v651 = vtanh.pop %v650
    %652 = vset.pattern.permute.xlu0 5
    %653 = vperm.xlu0 %652, %v21
    %v654 = vpop.permute.xlu0 %653
    %v657 = vrot.slane %v651, 4
    %v659 = vmul.f32 %v654, %v657
    %660 = vset.pattern.permute.xlu0 5
    %661 = vperm.xlu0 %660, %v210
    %v662 = vpop.permute.xlu0 %661
    %v664 = vmul.f32 %v662, %v573
    %v665 = vadd.f32 %v659, %v664
    %vm666 = vcmask 257024
    %667 = vst.msk [vmem:[#allocation2] sm:$0xf] %vm666, %v665
    // Predicated region
    $region18: #{tpu_custom_call.1} parent=1 // pred_check
      _
    $region19: #{tpu_custom_call.1} parent=1 // pred_check_branch
      %669 = sbr.rel (0) target = $region21
    $region20: #{tpu_custom_call.1} parent=1 // pred_region
      %s671 = ssub.s32 64, 64
      %672 = vsyncadd [#allocation3], %s671
      %s674 = sshll.u32 [#allocation2], 4
      %s675 = int_to_ptr.vmem [resolvable:$true] %s674
      %677 = dma.vmem_to_hbm [thread:$0]  %s675, 64, %s4, [#allocation3]
    $region21: #{tpu_custom_call.1} parent=1 // pred_fallthru
      _
    // Predicated region
    $region22: #{tpu_custom_call.1} parent=1 // pred_check
      _
    $region23: #{tpu_custom_call.1} parent=1 // pred_check_branch
      %679 = sbr.rel (0) target = $region25
    $region24: #{tpu_custom_call.1} parent=1 // pred_region
      %680 = dma.done [#allocation3], 64
    $region25: #{tpu_custom_call.1} parent=1 // pred_fallthru
      _
    %681 = vsyncpa [#allocation3], 1

</llo_original>
